<compile_context>
chip_gen: v7x
topology: tpu7x:2x2x1
jax: 0.10.0
libtpu: 0.0.40
codegen_flags: <defaults>
</compile_context>

<pallas_src>
import functools
import math

import jax
import jax.numpy as jnp
from jax.experimental import pallas as pl
from jax.experimental.pallas import tpu as pltpu

d_model = 256


def make_positional_encoding(max_len: int, d: int, dtype=jnp.float32):
    """Sinusoidal PE table as a dense 2-D (max_len, d_model) array.

    (The PyTorch module stores (max_len, 1, d_model); the wrapper accepts either.
    A size-1 sublane dim would force 8x VMEM padding + strided DMA on TPU.)"""
    position = jnp.arange(max_len, dtype=jnp.float32)[:, None]                 # (max_len, 1)
    div_term = jnp.exp(
        jnp.arange(0, d, 2, dtype=jnp.float32) * (-math.log(10000.0) / d)
    )                                                                           # (d/2,)
    angles = position * div_term                                                # (max_len, d/2)
    pe = jnp.zeros((max_len, d), jnp.float32)
    pe = pe.at[:, 0::2].set(jnp.sin(angles))
    pe = pe.at[:, 1::2].set(jnp.cos(angles))
    return pe.astype(dtype)                                                     # (max_len, d)


def _pe_add_kernel(x_ref, pe_ref, o_ref, *, batch):
    # x_ref/o_ref: (tile_s, B*D) lane-dense; pe_ref: (tile_s, D), already x.dtype.
    pe = pe_ref[...]
    if batch > 1:
        # Broadcast over batch: lane-aligned concat (D is a multiple of 128) -> (tile_s, B*D).
        pe = jnp.concatenate([pe] * batch, axis=-1)
    o_ref[...] = x_ref[...] + pe


def _pe_add_dropout_kernel(x_ref, pe_ref, u_ref, o_ref, *, batch, rate):
    pe = pe_ref[...]
    if batch > 1:
        pe = jnp.concatenate([pe] * batch, axis=-1)
    y = x_ref[...] + pe
    keep = u_ref[...] >= jnp.float32(rate)          # uniforms in [0,1): keep prob = 1 - rate
    scale = 1.0 / (1.0 - rate)                      # weak python float -> multiply stays in y.dtype
    o_ref[...] = jnp.where(keep, y * scale, jnp.zeros_like(y))


def _choose_tile_s(S, B, D, x_itemsize, pe_itemsize, training):
    # Per-sequence-row bytes of one buffer set (x tile + out tile [+ uniforms] + pe tile);
    # x2 for double buffering. All blocks are dense (no sublane padding) after the layout fix.
    per_row = 2 * B * D * x_itemsize + D * pe_itemsize
    if training:
        per_row += B * D * 4                        # float32 dropout uniforms
    budget = 8 * 1024 * 1024                        # fits v5e 16 MiB scoped default; fine on v6e/v7x
    t = budget // (2 * per_row)
    t = int(max(8, min(1024, t)))
    # On large inputs keep >= ~4 grid steps so both v7x TensorCores get work and the
    # DMA pipeline has depth.
    if S >= 256:
        t = min(t, ((pl.cdiv(S, 4) + 7) // 8) * 8)
    t = min(t, S)
    if t < S:
        t = max(8, (t // 8) * 8)                    # non-full blocks must be sublane(8)-aligned
    return int(t)


def position_encoding_forward(x, pe, *, dropout_rate=0.1, training=False, seed=0,
                              tile_s=None):
    """Pallas TPU forward of PositionEncoding.

    x : (S, B, D) = (seq_len, batch, d_model)   -- same layout as the PyTorch module.
    pe: (max_len, D) or (max_len, 1, D) sinusoidal table (constant buffer).
    Returns dropout(x + pe[:S]) with the same shape/dtype as x.
    """
    S, B, D = x.shape
    if pe.ndim == 3:                                  # accept the torch buffer layout
        assert pe.shape[1] == 1
        pe = pe.reshape(pe.shape[0], pe.shape[2])
    assert pe.ndim == 2 and pe.shape[1] == D
    assert S <= pe.shape[0], "sequence length exceeds max_len"

    # Constant-buffer prep in the wrapper (outside the hot loop):
    pe = pe[:S].astype(x.dtype)                       # slice + single dtype cast
    BD = B * D
    x2 = x.reshape(S, BD)                             # (S,B,D)->(S,B*D): free, lane-dense

    x_item = jnp.dtype(x.dtype).itemsize
    use_dropout = bool(training) and dropout_rate > 0.0
    if tile_s is None:
        tile_s = _choose_tile_s(S, B, D, x_item, x_item, use_dropout)
    tile_s = int(tile_s)
    assert tile_s == S or tile_s % 8 == 0, "tile_s must be 8-aligned or cover the full sequence"

    grid = (pl.cdiv(S, tile_s),)
    x_spec = pl.BlockSpec((tile_s, BD), lambda i: (i, 0))
    pe_spec = pl.BlockSpec((tile_s, D), lambda i: (i, 0))
    out_spec = pl.BlockSpec((tile_s, BD), lambda i: (i, 0))
    out_shape = jax.ShapeDtypeStruct((S, BD), x.dtype)
    cparams = pltpu.CompilerParams(dimension_semantics=("parallel",))

    if use_dropout:
        # TODO(synk): the in-kernel pltpu.prng_* hardware PRNG would avoid this extra HBM
        # stream, but it has no interpret-mode/CPU lowering; uniforms are streamed instead.
        u = jax.random.uniform(jax.random.PRNGKey(seed), (S, BD), jnp.float32)
        kernel = functools.partial(_pe_add_dropout_kernel, batch=B, rate=float(dropout_rate))
        cost = pl.CostEstimate(
            flops=4 * S * BD, transcendentals=0,
            bytes_accessed=2 * S * BD * x_item + S * BD * 4 + S * D * x_item)
        out2 = pl.pallas_call(
            kernel,
            out_shape=out_shape,
            grid_spec=pltpu.PrefetchScalarGridSpec(
                num_scalar_prefetch=0, grid=grid,
                in_specs=[x_spec, pe_spec, x_spec],   # uniforms tiled like x
                out_specs=out_spec),
            compiler_params=cparams,
            cost_estimate=cost,
        )(x2, pe, u)
    else:
        kernel = functools.partial(_pe_add_kernel, batch=B)
        cost = pl.CostEstimate(
            flops=S * BD, transcendentals=0,
            bytes_accessed=2 * S * BD * x_item + S * D * x_item)
        out2 = pl.pallas_call(
            kernel,
            out_shape=out_shape,
            grid_spec=pltpu.PrefetchScalarGridSpec(
                num_scalar_prefetch=0, grid=grid,
                in_specs=[x_spec, pe_spec],
                out_specs=out_spec),
            compiler_params=cparams,
            cost_estimate=cost,
        )(x2, pe)

    return out2.reshape(S, B, D)


if __name__ == "__main__":
    key = jax.random.PRNGKey(0)
    max_len = 64
    seq_len, batch = 8, 2
    p_drop = 0.1

    pe = make_positional_encoding(max_len, d_model)                      # (64, 256)
    x = jax.random.normal(key, (seq_len, batch, d_model), jnp.float32)   # (S, B, D)

    # Eval-mode forward (dropout is identity): exact check vs pure-JAX reference.
    out = jax.block_until_ready(
        position_encoding_forward(x, pe, dropout_rate=p_drop, training=False))
    ref = x + pe[:seq_len][:, None, :]
    assert out.shape == (seq_len, batch, d_model)
    assert jnp.allclose(out, ref, atol=1e-6, rtol=1e-6)

    # Sequence length not divisible by the tile (forced tile_s=8, S=20): masked trailing block.
    seq2 = 20
    x_odd = jax.random.normal(jax.random.PRNGKey(1), (seq2, batch, d_model), jnp.float32)
    out_odd = jax.block_until_ready(
        position_encoding_forward(x_odd, pe, dropout_rate=p_drop, training=False, tile_s=8))
    ref_odd = x_odd + pe[:seq2][:, None, :]
    assert jnp.allclose(out_odd, ref_odd, atol=1e-6, rtol=1e-6)

    # Training-mode forward: dropout keeps with prob (1-p) and scales by 1/(1-p).
    # NOTE: RNG stream differs from torch; semantics match.
    out_tr = jax.block_until_ready(
        position_encoding_forward(x, pe, dropout_rate=p_drop, training=True, seed=0))
    assert out_tr.shape == (seq_len, batch, d_model)
    assert bool(jnp.all(jnp.isfinite(out_tr)))
    scaled = ref / (1.0 - p_drop)
    ok = jnp.isclose(out_tr, scaled, atol=1e-5) | (out_tr == 0.0)
    assert bool(jnp.all(ok))
    zero_frac = float(jnp.mean((out_tr == 0.0).astype(jnp.float32)))
    assert 0.02 < zero_frac < 0.3, zero_frac          # ~p of elements dropped

    print("KERNEL_OK")
</pallas_src>

<mosaic_0001>
module attributes {stable_mosaic.version = 11 : i64} {
  func.func @_pe_add_kernel(%arg0: i32, %arg1: memref<8x512xf32, #tpu.memory_space<vmem>>, %arg2: memref<8x256xf32, #tpu.memory_space<vmem>>, %arg3: memref<8x512xf32, #tpu.memory_space<vmem>>) attributes {dimension_semantics = [#tpu.dimension_semantics<parallel>], iteration_bounds = array<i64: 1>, scalar_prefetch = 0 : i64, scratch_operands = 0 : i64, tpu.core_type = #tpu.core_type<tc>, window_params = [{transform_indices = @transform_0, window_bounds = array<i64: 8, 512>}, {transform_indices = @transform_1, window_bounds = array<i64: 8, 256>}, {transform_indices = @transform_2, window_bounds = array<i64: 8, 512>}]} {
    %c0 = arith.constant 0 : index
    %c0_0 = arith.constant 0 : index
    %0 = vector.load %arg2[%c0, %c0_0] : memref<8x256xf32, #tpu.memory_space<vmem>>, vector<8x256xf32>
    %1 = tpu.concatenate %0, %0 in 1 : vector<8x256xf32>, vector<8x256xf32> -> vector<8x512xf32>
    %c0_1 = arith.constant 0 : index
    %c0_2 = arith.constant 0 : index
    %2 = vector.load %arg1[%c0_1, %c0_2] : memref<8x512xf32, #tpu.memory_space<vmem>>, vector<8x512xf32>
    %3 = arith.addf %2, %1 : vector<8x512xf32>
    %c0_3 = arith.constant 0 : index
    %c0_4 = arith.constant 0 : index
    %4 = vector.load %arg3[%c0_3, %c0_4] : memref<8x512xf32, #tpu.memory_space<vmem>>, vector<8x512xf32>
    tpu.vector_store %arg3[%c0_3, %c0_4], %3 {strides = array<i32>} : memref<8x512xf32, #tpu.memory_space<vmem>>, vector<8x512xf32>,
    return
  }
  func.func @transform_0(%arg0: i32) -> (i32, i32) {
    %c0_i32 = arith.constant 0 : i32
    %c0_i32_0 = arith.constant 0 : i32
    return %arg0, %c0_i32 : i32, i32
  }
  func.func @transform_1(%arg0: i32) -> (i32, i32) {
    %c0_i32 = arith.constant 0 : i32
    %c0_i32_0 = arith.constant 0 : i32
    return %arg0, %c0_i32 : i32, i32
  }
  func.func @transform_2(%arg0: i32) -> (i32, i32) {
    %c0_i32 = arith.constant 0 : i32
    %c0_i32_0 = arith.constant 0 : i32
    return %arg0, %c0_i32 : i32, i32
  }
}

</mosaic_0001>

<llo_original>
// kernel: tpu_custom_call.1
$region0: #{tpu_custom_call.1}
  #allocation0 [shape = 'u32[]', space=smem, size = 0x4, offset = 0x4, fixed_abs, tag = 'smem constant byte address 0x4 - core index']
  #allocation1 [shape = 'u32[144,128]{1,0:T(1,128)}', space=vmem, size = 0x12000, scoped, tag = 'internal scratch']
  %s0 = inlined_call_operand.hbm [shape: f32[8,512], index: 0, kind: input, shape index: {}]
  %s1 = inlined_call_operand.hbm [shape: f32[8,256], index: 1, kind: input, shape index: {}]
  %s2 = inlined_call_operand.hbm [shape: f32[8,512], index: 2, kind: output, shape index: {}]
  %s3 = sld [smem:[#allocation0]]
  $region26: #{tpu_custom_call.1} parent=0
    _
  %s5 = ssub.s32 1, %s3
  %s6 = scalar_select 0, %s5, %s3
  $region1: #{tpu_custom_call.1} parent=0
    #allocation2 [shape = 'u8[16384]{0}', space=vmem, size = 0x4000, scoped, tag = 'input window, operand 0, single buffered']
    #allocation3 [shape = 's32[1]{0}', space=sflag, size = 0x4, scoped, tag = 'scoped memory for tpu_custom_call.1']
    #allocation4 [shape = 's32[1]{0}', space=sflag, size = 0x4, scoped, tag = 'scoped memory for tpu_custom_call.1']
    #allocation5 [shape = 'u8[8192]{0}', space=vmem, size = 0x2000, scoped, tag = 'input window, operand 1, single buffered']
    #allocation6 [shape = 's32[1]{0}', space=sflag, size = 0x4, scoped, tag = 'scoped memory for tpu_custom_call.1']
    #allocation7 [shape = 'u8[16384]{0}', space=vmem, size = 0x4000, scoped, tag = 'output window, operand 0, single buffered']
    %7 = vsyncpa [#allocation3], 0
    %8 = vsyncpa [#allocation6], 0
    %9 = vsyncpa [#allocation4], 0
    // Predicated region
    $region2: #{tpu_custom_call.1} parent=1 // pred_check
      _
    $region3: #{tpu_custom_call.1} parent=1 // pred_check_branch
      %11 = sbr.rel (0) target = $region5
    $region4: #{tpu_custom_call.1} parent=1 // pred_region
      %s13 = ssub.s32 512, 512
      %14 = vsyncadd [#allocation3], %s13
      %s16 = sshll.u32 [#allocation2], 4
      %s17 = int_to_ptr.vmem [resolvable:$true] %s16
      %19 = dma.hbm_to_vmem [thread:$0]  %s0, 512, %s17, [#allocation3]
    $region5: #{tpu_custom_call.1} parent=1 // pred_fallthru
      _
    // Predicated region
    $region6: #{tpu_custom_call.1} parent=1 // pred_check
      _
    $region7: #{tpu_custom_call.1} parent=1 // pred_check_branch
      %21 = sbr.rel (0) target = $region9
    $region8: #{tpu_custom_call.1} parent=1 // pred_region
      %s23 = ssub.s32 256, 256
      %24 = vsyncadd [#allocation6], %s23
      %s26 = sshll.u32 [#allocation5], 4
      %s27 = int_to_ptr.vmem [resolvable:$true] %s26
      %29 = dma.hbm_to_vmem [thread:$0]  %s1, 256, %s27, [#allocation6]
    $region9: #{tpu_custom_call.1} parent=1 // pred_fallthru
      _
    // Predicated region
    $region10: #{tpu_custom_call.1} parent=1 // pred_check
      _
    $region11: #{tpu_custom_call.1} parent=1 // pred_check_branch
      %31 = sbr.rel (0) target = $region13
    $region12: #{tpu_custom_call.1} parent=1 // pred_region
      %32 = dma.done [#allocation3], 512
    $region13: #{tpu_custom_call.1} parent=1 // pred_fallthru
      _
    // Predicated region
    $region14: #{tpu_custom_call.1} parent=1 // pred_check
      _
    $region15: #{tpu_custom_call.1} parent=1 // pred_check_branch
      %34 = sbr.rel (0) target = $region17
    $region16: #{tpu_custom_call.1} parent=1 // pred_region
      %35 = dma.done [#allocation6], 256
    $region17: #{tpu_custom_call.1} parent=1 // pred_fallthru
      _
    %v36 = vld [vmem:[#allocation5] sm:$0xff]
    %v37 = vld [vmem:[#allocation5 + $0x8] sm:$0xff]
    %v38 = vld [vmem:[#allocation2] sm:$0xff]
    %v39 = vld [vmem:[#allocation2 + $0x8] sm:$0xff]
    %v40 = vld [vmem:[#allocation2 + $0x10] sm:$0xff]
    %v41 = vld [vmem:[#allocation2 + $0x18] sm:$0xff]
    %v42 = vadd.f32 %v38, %v36
    %v43 = vadd.f32 %v39, %v37
    %v44 = vadd.f32 %v40, %v36
    %v45 = vadd.f32 %v41, %v37
    %46 = vst [vmem:[#allocation7] sm:$0xff] %v42
    %47 = vst [vmem:[#allocation7 + $0x8] sm:$0xff] %v43
    %48 = vst [vmem:[#allocation7 + $0x10] sm:$0xff] %v44
    %49 = vst [vmem:[#allocation7 + $0x18] sm:$0xff] %v45
    // Predicated region
    $region18: #{tpu_custom_call.1} parent=1 // pred_check
      _
    $region19: #{tpu_custom_call.1} parent=1 // pred_check_branch
      %51 = sbr.rel (0) target = $region21
    $region20: #{tpu_custom_call.1} parent=1 // pred_region
      %s53 = ssub.s32 512, 512
      %54 = vsyncadd [#allocation4], %s53
      %s56 = sshll.u32 [#allocation7], 4
      %s57 = int_to_ptr.vmem [resolvable:$true] %s56
      %59 = dma.vmem_to_hbm [thread:$0]  %s57, 512, %s2, [#allocation4]
    $region21: #{tpu_custom_call.1} parent=1 // pred_fallthru
      _
    // Predicated region
    $region22: #{tpu_custom_call.1} parent=1 // pred_check
      _
    $region23: #{tpu_custom_call.1} parent=1 // pred_check_branch
      %61 = sbr.rel (0) target = $region25
    $region24: #{tpu_custom_call.1} parent=1 // pred_region
      %62 = dma.done [#allocation4], 512
    $region25: #{tpu_custom_call.1} parent=1 // pred_fallthru
      _
    %63 = vsyncpa [#allocation3], 1
    %64 = vsyncpa [#allocation6], 1
    %65 = vsyncpa [#allocation4], 1

</llo_original>
